<compile_context>
chip_gen: v7x
topology: tpu7x:2x2x1
jax: 0.10.0
libtpu: 0.0.40
codegen_flags: <defaults>
</compile_context>

<pallas_src>
import functools

import jax
import jax.numpy as jnp
from jax import lax
from jax.experimental import pallas as pl
from jax.experimental.pallas import tpu as pltpu

NUM_STEPS = 1
STEP_SIZE = 1e-3
EPSILON = 1e-6
NOISE_VAR = 1e-5


def smart_loss_kernel(embed_ref, noise_ref, state_ref, w_ref, b_ref, out_ref, *,
                      num_steps, step_size, epsilon, noise_var, inv_n):
    # bf16 operands for the MXU.
    embed_bf = embed_ref[...]                                    # [TB, H] bf16
    w = w_ref[...]                                               # [H, C]  bf16

    # f32 for all VPU math (v5e has no bf16 VPU/EUP).
    embed = embed_bf.astype(jnp.float32)                         # [TB, H] f32
    noise = noise_ref[...].astype(jnp.float32) * noise_var       # randn * noise_var
    # Fold the bias into the target once per tile (drops the +b per step).
    target = state_ref[...] - b_ref[...]                         # [TB, C] f32

    # step_size * d(MSE)/d(state_p) scale folded into one scalar constant.
    grad_coeff = 2.0 * inv_n * step_size

    # Static unroll of the SMART inner loop (i == num_steps -> final loss).
    for i in range(num_steps + 1):
        embed_p = (embed + noise).astype(jnp.bfloat16)           # MXU input
        state_p = jnp.dot(embed_p, w, preferred_element_type=jnp.float32)
        diff = state_p - target                                  # [TB, C] f32
        if i == num_steps:
            # Per-tile sum of squares; the global mean normalizer is applied in
            # the wrapper.  Broadcast to a full (1, 8, 128) vreg -> unmasked store.
            partial = jnp.sum(diff * diff)
            out_ref[...] = jnp.zeros(out_ref.shape, jnp.float32) + partial
            break
        # Analytic grad wrt noise: (2/(B*C)) * diff @ W^T, contracted over C of
        # both operands so W is consumed by the MXU without a transpose.
        g = lax.dot_general(diff.astype(jnp.bfloat16), w,
                            dimension_numbers=(((1,), (1,)), ((), ())),
                            preferred_element_type=jnp.float32)  # [TB, H] f32
        step = noise + grad_coeff * g
        step_norm = jnp.max(jnp.abs(step), axis=-1, keepdims=True)      # inf_norm
        noise = step * pl.reciprocal(step_norm + epsilon, approx=True)  # EUP recip


def _vmem_limit_bytes():
    """Half of physical VMEM (64 MiB v5e/v6e, 32 MiB v7x); safe fallback 32 MiB."""
    try:
        phys = pltpu.get_tpu_info().vmem_capacity_bytes
    except Exception:
        phys = 64 * 1024 * 1024
    return phys // 2


def _auto_tile_b(total_b, hidden, n_cls, budget, max_tile=1024):
    """Largest multiple-of-8 batch tile (dividing B) whose blocks fit `budget`."""
    # Per batch-row bytes: double-buffered bf16 embed + noise tiles, double-buffered
    # f32 state tile, plus in-kernel f32 embed/noise temporaries.
    per_row = 16 * hidden + 8 * n_cls
    tb = max(8, min(max_tile, budget // max(per_row, 1), total_b))
    tb -= tb % 8
    if tb <= 0:
        return total_b
    while total_b % tb != 0:
        tb -= 8
        if tb <= 0:
            return total_b
    return tb


def smart_loss(embed, noise, state, w, b, *,
               num_steps=NUM_STEPS, step_size=STEP_SIZE,
               epsilon=EPSILON, noise_var=NOISE_VAR, tile_b=None):
    total_b, hidden = embed.shape
    n_cls = state.shape[1]

    vmem_limit = _vmem_limit_bytes()
    if tile_b is None:
        tile_b = _auto_tile_b(total_b, hidden, n_cls, budget=vmem_limit // 2)
    assert total_b % tile_b == 0, (total_b, tile_b)
    assert tile_b == total_b or tile_b % 8 == 0, tile_b
    num_tiles = total_b // tile_b
    inv_n = 1.0 / (total_b * n_cls)          # global MSE 'mean' normalizer

    # bf16 for the big [B, H] arrays and W (halves HBM traffic, bf16 MXU path);
    # targets stay f32.
    embed_bf = embed.astype(jnp.bfloat16)
    noise_bf = noise.astype(jnp.bfloat16)
    w_bf = w.astype(jnp.bfloat16)
    state_f = state.astype(jnp.float32)
    b_f = b.astype(jnp.float32)

    kernel = functools.partial(
        smart_loss_kernel, num_steps=num_steps, step_size=step_size,
        epsilon=epsilon, noise_var=noise_var, inv_n=inv_n)

    partials = pl.pallas_call(
        kernel,
        out_shape=jax.ShapeDtypeStruct((num_tiles, 8, 128), jnp.float32),
        grid=(num_tiles,),
        in_specs=[
            pl.BlockSpec((tile_b, hidden), lambda i: (i, 0)),   # embed  (bf16)
            pl.BlockSpec((tile_b, hidden), lambda i: (i, 0)),   # raw gaussian noise (bf16)
            pl.BlockSpec((tile_b, n_cls), lambda i: (i, 0)),    # state / target (f32)
            pl.BlockSpec((hidden, n_cls), lambda i: (0, 0)),    # W of eval_fn, resident
            pl.BlockSpec((1, n_cls), lambda i: (0, 0)),         # b of eval_fn, resident
        ],
        out_specs=pl.BlockSpec((1, 8, 128), lambda i: (i, 0, 0)),  # lane-dense partials
        compiler_params=pltpu.CompilerParams(
            dimension_semantics=("parallel",),                  # both TCs on v7x
            vmem_limit_bytes=vmem_limit),
    )(embed_bf, noise_bf, state_f, w_bf, b_f)

    # Tiny final reduction over per-tile partial sums (plain JAX).
    return jnp.sum(partials[:, 0, 0]) * inv_n


def smart_loss_ref(embed, noise, state, w, b, *,
                   num_steps=NUM_STEPS, step_size=STEP_SIZE,
                   epsilon=EPSILON, noise_var=NOISE_VAR):
    """Pure-JAX reference mirroring the kernel's bf16-MXU / f32-VPU numerics."""
    total_b, n_cls = state.shape
    inv_n = 1.0 / (total_b * n_cls)
    grad_coeff = 2.0 * inv_n * step_size

    embed_f = embed.astype(jnp.bfloat16).astype(jnp.float32)
    n = noise.astype(jnp.bfloat16).astype(jnp.float32) * noise_var
    w_bf = w.astype(jnp.bfloat16)
    target = state.astype(jnp.float32) - b.astype(jnp.float32)

    for i in range(num_steps + 1):
        ep = (embed_f + n).astype(jnp.bfloat16)
        sp = jnp.dot(ep, w_bf, preferred_element_type=jnp.float32)
        diff = sp - target
        if i == num_steps:
            return jnp.sum(diff * diff) * inv_n
        g = lax.dot_general(diff.astype(jnp.bfloat16), w_bf,
                            dimension_numbers=(((1,), (1,)), ((), ())),
                            preferred_element_type=jnp.float32)
        step = n + grad_coeff * g
        step_norm = jnp.max(jnp.abs(step), axis=-1, keepdims=True)
        n = step / (step_norm + epsilon)   # exact divide; kernel uses EUP approx recip


if __name__ == "__main__":
    BATCH, SEQ, HIDDEN, CLASSES = 8, 32, 128, 32
    B = BATCH * SEQ                      # SMART runs on flattened [batch*seq, hidden]

    key = jax.random.PRNGKey(0)
    k_embed, k_noise, k_w, k_state = jax.random.split(key, 4)

    embed = jax.random.normal(k_embed, (B, HIDDEN), dtype=jnp.float32)
    noise = jax.random.normal(k_noise, (B, HIDDEN), dtype=jnp.float32)  # randn_like(embed)
    # Deterministic eval_fn (linear head) parameters.
    w = 0.02 * jax.random.normal(k_w, (HIDDEN, CLASSES), dtype=jnp.float32)
    b = jnp.zeros((1, CLASSES), dtype=jnp.float32)
    # "state" is the clean-input prediction plus a small perturbation so the loss
    # is non-trivially nonzero.
    state = embed @ w + b + 0.01 * jax.random.normal(k_state, (B, CLASSES), jnp.float32)

    # Multi-tile path (grid=(4,)) and the auto-tiled path.
    loss_tiled = jax.block_until_ready(smart_loss(embed, noise, state, w, b, tile_b=64))
    loss_auto = jax.block_until_ready(smart_loss(embed, noise, state, w, b))
    loss_ref = smart_loss_ref(embed, noise, state, w, b)

    assert jnp.isfinite(loss_tiled) and jnp.isfinite(loss_auto), (loss_tiled, loss_auto)
    # Tolerance covers the EUP approximate reciprocal + accumulation-order drift.
    assert jnp.allclose(loss_tiled, loss_ref, rtol=2e-2, atol=1e-7), (loss_tiled, loss_ref)
    assert jnp.allclose(loss_auto, loss_tiled, rtol=1e-4, atol=1e-9), (loss_auto, loss_tiled)
    print("KERNEL_OK")
</pallas_src>

<mosaic_0001>
module attributes {stable_mosaic.version = 11 : i64} {
  func.func @smart_loss_kernel(%arg0: i32, %arg1: memref<64x128xbf16, #tpu.memory_space<vmem>>, %arg2: memref<64x128xbf16, #tpu.memory_space<vmem>>, %arg3: memref<64x32xf32, #tpu.memory_space<vmem>>, %arg4: memref<128x32xbf16, #tpu.memory_space<vmem>>, %arg5: memref<1x32xf32, #tpu.memory_space<vmem>>, %arg6: memref<1x8x128xf32, #tpu.memory_space<vmem>>) attributes {dimension_semantics = [#tpu.dimension_semantics<parallel>], iteration_bounds = array<i64: 4>, scalar_prefetch = 0 : i64, scratch_operands = 0 : i64, tpu.core_type = #tpu.core_type<tc>, window_params = [{transform_indices = @transform_0, window_bounds = array<i64: 64, 128>}, {transform_indices = @transform_1, window_bounds = array<i64: 64, 128>}, {transform_indices = @transform_2, window_bounds = array<i64: 64, 32>}, {pipeline_mode = #tpu.pipeline_mode<synchronous>, transform_indices = @transform_3, window_bounds = array<i64: 128, 32>}, {pipeline_mode = #tpu.pipeline_mode<synchronous>, transform_indices = @transform_4, window_bounds = array<i64: 1, 32>}, {transform_indices = @transform_5, window_bounds = array<i64: 1, 8, 128>}]} {
    %c0 = arith.constant 0 : index
    %c0_0 = arith.constant 0 : index
    %0 = vector.load %arg1[%c0, %c0_0] : memref<64x128xbf16, #tpu.memory_space<vmem>>, vector<64x128xbf16>
    %c0_1 = arith.constant 0 : index
    %c0_2 = arith.constant 0 : index
    %1 = vector.load %arg4[%c0_1, %c0_2] : memref<128x32xbf16, #tpu.memory_space<vmem>>, vector<128x32xbf16>
    %2 = arith.extf %0 : vector<64x128xbf16> to vector<64x128xf32>
    %c0_3 = arith.constant 0 : index
    %c0_4 = arith.constant 0 : index
    %3 = vector.load %arg2[%c0_3, %c0_4] : memref<64x128xbf16, #tpu.memory_space<vmem>>, vector<64x128xbf16>
    %4 = arith.extf %3 : vector<64x128xbf16> to vector<64x128xf32>
    %cst = arith.constant 9.99999974E-6 : f32
    %5 = vector.broadcast %cst : f32 to vector<64x128xf32>
    %6 = arith.mulf %4, %5 : vector<64x128xf32>
    %c0_5 = arith.constant 0 : index
    %c0_6 = arith.constant 0 : index
    %7 = vector.load %arg3[%c0_5, %c0_6] : memref<64x32xf32, #tpu.memory_space<vmem>>, vector<64x32xf32>
    %c0_7 = arith.constant 0 : index
    %c0_8 = arith.constant 0 : index
    %8 = vector.load %arg5[%c0_7, %c0_8] : memref<1x32xf32, #tpu.memory_space<vmem>>, vector<1x32xf32>
    %9 = vector.broadcast %8 : vector<1x32xf32> to vector<64x32xf32>
    %10 = arith.subf %7, %9 : vector<64x32xf32>
    %11 = arith.addf %2, %6 : vector<64x128xf32>
    %12 = arith.truncf %11 : vector<64x128xf32> to vector<64x128xbf16>
    %cst_9 = arith.constant dense<0.000000e+00> : vector<64x32xf32>
    %13 = tpu.matmul %12, %1, %cst_9 {dimension_numbers = #tpu.dot_dimension_numbers<[1], [0], [0], [1], [0, 0, 1, 1], [], []>} : vector<64x128xbf16>, vector<128x32xbf16>, vector<64x32xf32> -> vector<64x32xf32>
    %14 = arith.subf %13, %10 : vector<64x32xf32>
    %15 = arith.truncf %14 : vector<64x32xf32> to vector<64x32xbf16>
    %cst_10 = arith.constant dense<0.000000e+00> : vector<64x128xf32>
    %16 = tpu.matmul %15, %1, %cst_10 {dimension_numbers = #tpu.dot_dimension_numbers<[1], [1], [0], [0], [0, 0, 1, 0], [], []>} : vector<64x32xbf16>, vector<128x32xbf16>, vector<64x128xf32> -> vector<64x128xf32>
    %cst_11 = arith.constant 2.44140637E-7 : f32
    %17 = vector.broadcast %cst_11 : f32 to vector<64x128xf32>
    %18 = arith.mulf %17, %16 : vector<64x128xf32>
    %19 = arith.addf %6, %18 : vector<64x128xf32>
    %20 = math.absf %19 : vector<64x128xf32>
    %cst_12 = arith.constant dense<0xFF800000> : vector<64xf32>
    %21 = vector.multi_reduction <maximumf>, %20, %cst_12 [1] : vector<64x128xf32> to vector<64xf32>
    %22 = vector.shape_cast %21 : vector<64xf32> to vector<64x1xf32>
    %cst_13 = arith.constant 9.99999997E-7 : f32
    %23 = vector.broadcast %cst_13 : f32 to vector<64x1xf32>
    %24 = arith.addf %22, %23 : vector<64x1xf32>
    %25 = tpu.reciprocal %24 {approx = true} : vector<64x1xf32> -> vector<64x1xf32>
    %26 = vector.broadcast %25 : vector<64x1xf32> to vector<64x128xf32>
    %27 = arith.mulf %19, %26 : vector<64x128xf32>
    %28 = arith.addf %2, %27 : vector<64x128xf32>
    %29 = arith.truncf %28 : vector<64x128xf32> to vector<64x128xbf16>
    %cst_14 = arith.constant dense<0.000000e+00> : vector<64x32xf32>
    %30 = tpu.matmul %29, %1, %cst_14 {dimension_numbers = #tpu.dot_dimension_numbers<[1], [0], [0], [1], [0, 0, 1, 1], [], []>} : vector<64x128xbf16>, vector<128x32xbf16>, vector<64x32xf32> -> vector<64x32xf32>
    %31 = arith.subf %30, %10 : vector<64x32xf32>
    %32 = arith.mulf %31, %31 : vector<64x32xf32>
    %33 = vector.shape_cast %32 : vector<64x32xf32> to vector<1x64x32xf32>
    %cst_15 = arith.constant dense<0.000000e+00> : vector<1xf32>
    %34 = vector.multi_reduction <add>, %33, %cst_15 [1, 2] : vector<1x64x32xf32> to vector<1xf32>
    %35 = vector.shape_cast %34 : vector<1xf32> to vector<1x1x1xf32>
    %36 = vector.extract %35[0, 0, 0] : f32 from vector<1x1x1xf32>
    %cst_16 = arith.constant 0.000000e+00 : f32
    %37 = vector.broadcast %cst_16 : f32 to vector<1x8x128xf32>
    %38 = vector.broadcast %36 : f32 to vector<1x8x128xf32>
    %39 = arith.addf %37, %38 : vector<1x8x128xf32>
    %c0_17 = arith.constant 0 : index
    %c0_18 = arith.constant 0 : index
    %c0_19 = arith.constant 0 : index
    %40 = vector.load %arg6[%c0_17, %c0_18, %c0_19] : memref<1x8x128xf32, #tpu.memory_space<vmem>>, vector<1x8x128xf32>
    tpu.vector_store %arg6[%c0_17, %c0_18, %c0_19], %39 {strides = array<i32>} : memref<1x8x128xf32, #tpu.memory_space<vmem>>, vector<1x8x128xf32>,
    return
  }
  func.func @transform_0(%arg0: i32) -> (i32, i32) {
    %c0_i32 = arith.constant 0 : i32
    %c0_i32_0 = arith.constant 0 : i32
    return %arg0, %c0_i32 : i32, i32
  }
  func.func @transform_1(%arg0: i32) -> (i32, i32) {
    %c0_i32 = arith.constant 0 : i32
    %c0_i32_0 = arith.constant 0 : i32
    return %arg0, %c0_i32 : i32, i32
  }
  func.func @transform_2(%arg0: i32) -> (i32, i32) {
    %c0_i32 = arith.constant 0 : i32
    %c0_i32_0 = arith.constant 0 : i32
    return %arg0, %c0_i32 : i32, i32
  }
  func.func @transform_3(%arg0: i32) -> (i32, i32) {
    %c0_i32 = arith.constant 0 : i32
    %c0_i32_0 = arith.constant 0 : i32
    %c0_i32_1 = arith.constant 0 : i32
    return %c0_i32, %c0_i32_0 : i32, i32
  }
  func.func @transform_4(%arg0: i32) -> (i32, i32) {
    %c0_i32 = arith.constant 0 : i32
    %c0_i32_0 = arith.constant 0 : i32
    %c0_i32_1 = arith.constant 0 : i32
    return %c0_i32, %c0_i32_0 : i32, i32
  }
  func.func @transform_5(%arg0: i32) -> (i32, i32, i32) {
    %c0_i32 = arith.constant 0 : i32
    %c0_i32_0 = arith.constant 0 : i32
    %c0_i32_1 = arith.constant 0 : i32
    return %arg0, %c0_i32, %c0_i32_0 : i32, i32, i32
  }
}

</mosaic_0001>

<llo_original>
// kernel: tpu_custom_call.1
$region0: #{tpu_custom_call.1}
  #allocation0 [shape = 'u32[]', space=smem, size = 0x4, offset = 0x4, fixed_abs, tag = 'smem constant byte address 0x4 - core index']
  #allocation1 [shape = 'u32[144,128]{1,0:T(1,128)}', space=vmem, size = 0x12000, scoped, tag = 'internal scratch']
  %s0 = inlined_call_operand.vmem [shape: bf16[256,128], index: 0, kind: input, shape index: {}]
  %s1 = inlined_call_operand.vmem [shape: bf16[256,128], index: 1, kind: input, shape index: {}]
  %s2 = inlined_call_operand.vmem [shape: f32[256,32], index: 2, kind: input, shape index: {}]
  %s3 = inlined_call_operand.vmem [shape: bf16[128,32], index: 3, kind: input, shape index: {}]
  %s4 = inlined_call_operand.vmem [shape: f32[1,32], index: 4, kind: input, shape index: {}]
  %s5 = inlined_call_operand.hbm [shape: f32[4,8,128], index: 5, kind: output, shape index: {}]
  %s6 = sld [smem:[#allocation0]]
  $region53: #{tpu_custom_call.1} parent=0
    _
  %s8 = ssub.s32 1, %s6
  %s9 = scalar_select 0, %s8, %s6
  $region1: #{tpu_custom_call.1} parent=0
    #allocation2 [shape = 'u8[8192]{0}', space=vmem, size = 0x2000, scoped, tag = 'output window, operand 0']
    #allocation3 [shape = 's32[2]{0}', space=sflag, size = 0x8, scoped, tag = 'scoped memory for tpu_custom_call.1']
    %10 = vsyncpa [#allocation3], 0
    %s11 = scalar_lea.sflag [#allocation3], 1
    %12 = vsyncpa %s11, 0
    loop: start=0, step=1, limit=6
    $region2: #{tpu_custom_call.1} parent=1 // loop_pre_header
      _
    $region3: #{tpu_custom_call.1} parent=1 // loop_header
      %s14 = sphi 0, %s18
      %p15 = scmp.ge.s32.totalorder %s14, 6
      %s24 = sphi 0, %s26
      %s27 = sphi 0, %s24
      %s28 = sphi 0, %s27
      %s44 = sphi 0, %s28
      %s50 = sphi 0, %s52
      %s53 = sphi 0, %s50
      %s54 = sphi 0, %s53
      %s70 = sphi 0, %s54
      %s76 = sphi 0, %s78
      %s79 = sphi 0, %s76
      %s80 = sphi 0, %s79
      %s96 = sphi 0, %s80
      %s100 = sphi 0, %s100
      %s102 = sphi 0, %s100
      %s103 = sphi 0, %s102
      %s117 = sphi 0, %s103
      %s121 = sphi 0, %s121
      %s123 = sphi 0, %s121
      %s124 = sphi 0, %s123
      %s138 = sphi 0, %s124
      %s144 = sphi 0, %s146
      %s147 = sphi 0, %s144
      %s148 = sphi 0, %s147
      %s164 = sphi 0, %s148
    $region4: #{tpu_custom_call.1} parent=1 // loop_header_branch
      %17 = sbr.rel (%p15) target = $region8
    $region5: #{tpu_custom_call.1} parent=1 // loop_body
      %s19 = ssub.s32 %s14, 1
      %s20 = ssub.s32 %s14, 2
      %s21 = sadd.s32 %s14, 1
      %s22 = ssub.s32 %s14, %s21
      %p23 = scmp.eq.s32.totalorder %s22, 0
      %s25 = sadd.s32 %s24, 1
      %s26 = scalar_select %p23, %s24, %s25
      %p29 = pneg %p23
      %p30 = scmp.eq.s32.totalorder %s14, 3
      %p31 = por %p29, %p30
      %p32 = scmp.ne.s32.totalorder %s24, %s27
      %p33 = scmp.eq.s32.totalorder %s14, 0
      %p34 = por %p32, %p33
      %p35 = scmp.ne.s32.totalorder %s24, %s27
      %p36 = scmp.eq.s32.totalorder %s19, 3
      %p37 = por %p35, %p36
      %p38 = scmp.ne.s32.totalorder %s27, %s28
      %p39 = scmp.eq.s32.totalorder %s19, 0
      %p40 = por %p38, %p39
      %p41 = scmp.ne.s32.totalorder %s27, %s28
      %p42 = scmp.eq.s32.totalorder %s20, 3
      %p43 = por %p41, %p42
      %p45 = scmp.ne.s32.totalorder %s28, %s44
      %p46 = scmp.eq.s32.totalorder %s20, 0
      %p47 = por %p45, %p46
      %s48 = ssub.s32 %s14, %s21
      %p49 = scmp.eq.s32.totalorder %s48, 0
      %s51 = sadd.s32 %s50, 1
      %s52 = scalar_select %p49, %s50, %s51
      %p55 = pneg %p49
      %p56 = scmp.eq.s32.totalorder %s14, 3
      %p57 = por %p55, %p56
      %p58 = scmp.ne.s32.totalorder %s50, %s53
      %p59 = scmp.eq.s32.totalorder %s14, 0
      %p60 = por %p58, %p59
      %p61 = scmp.ne.s32.totalorder %s50, %s53
      %p62 = scmp.eq.s32.totalorder %s19, 3
      %p63 = por %p61, %p62
      %p64 = scmp.ne.s32.totalorder %s53, %s54
      %p65 = scmp.eq.s32.totalorder %s19, 0
      %p66 = por %p64, %p65
      %p67 = scmp.ne.s32.totalorder %s53, %s54
      %p68 = scmp.eq.s32.totalorder %s20, 3
      %p69 = por %p67, %p68
      %p71 = scmp.ne.s32.totalorder %s54, %s70
      %p72 = scmp.eq.s32.totalorder %s20, 0
      %p73 = por %p71, %p72
      %s74 = ssub.s32 %s14, %s21
      %p75 = scmp.eq.s32.totalorder %s74, 0
      %s77 = sadd.s32 %s76, 1
      %s78 = scalar_select %p75, %s76, %s77
      %p81 = pneg %p75
      %p82 = scmp.eq.s32.totalorder %s14, 3
      %p83 = por %p81, %p82
      %p84 = scmp.ne.s32.totalorder %s76, %s79
      %p85 = scmp.eq.s32.totalorder %s14, 0
      %p86 = por %p84, %p85
      %p87 = scmp.ne.s32.totalorder %s76, %s79
      %p88 = scmp.eq.s32.totalorder %s19, 3
      %p89 = por %p87, %p88
      %p90 = scmp.ne.s32.totalorder %s79, %s80
      %p91 = scmp.eq.s32.totalorder %s19, 0
      %p92 = por %p90, %p91
      %p93 = scmp.ne.s32.totalorder %s79, %s80
      %p94 = scmp.eq.s32.totalorder %s20, 3
      %p95 = por %p93, %p94
      %p97 = scmp.ne.s32.totalorder %s80, %s96
      %p98 = scmp.eq.s32.totalorder %s20, 0
      %p99 = por %p97, %p98
      %s101 = sadd.s32 %s100, 1
      %p104 = scmp.eq.s32.totalorder %s14, 3
      %p105 = scmp.ne.s32.totalorder %s100, %s102
      %p106 = scmp.eq.s32.totalorder %s14, 0
      %p107 = por %p105, %p106
      %p108 = scmp.ne.s32.totalorder %s100, %s102
      %p109 = scmp.eq.s32.totalorder %s19, 3
      %p110 = por %p108, %p109
      %p111 = scmp.ne.s32.totalorder %s102, %s103
      %p112 = scmp.eq.s32.totalorder %s19, 0
      %p113 = por %p111, %p112
      %p114 = scmp.ne.s32.totalorder %s102, %s103
      %p115 = scmp.eq.s32.totalorder %s20, 3
      %p116 = por %p114, %p115
      %p118 = scmp.ne.s32.totalorder %s103, %s117
      %p119 = scmp.eq.s32.totalorder %s20, 0
      %p120 = por %p118, %p119
      %s122 = sadd.s32 %s121, 1
      %p125 = scmp.eq.s32.totalorder %s14, 3
      %p126 = scmp.ne.s32.totalorder %s121, %s123
      %p127 = scmp.eq.s32.totalorder %s14, 0
      %p128 = por %p126, %p127
      %p129 = scmp.ne.s32.totalorder %s121, %s123
      %p130 = scmp.eq.s32.totalorder %s19, 3
      %p131 = por %p129, %p130
      %p132 = scmp.ne.s32.totalorder %s123, %s124
      %p133 = scmp.eq.s32.totalorder %s19, 0
      %p134 = por %p132, %p133
      %p135 = scmp.ne.s32.totalorder %s123, %s124
      %p136 = scmp.eq.s32.totalorder %s20, 3
      %p137 = por %p135, %p136
      %p139 = scmp.ne.s32.totalorder %s124, %s138
      %p140 = scmp.eq.s32.totalorder %s20, 0
      %p141 = por %p139, %p140
      %s142 = ssub.s32 %s14, %s21
      %p143 = scmp.eq.s32.totalorder %s142, 0
      %s145 = sadd.s32 %s144, 1
      %s146 = scalar_select %p143, %s144, %s145
      %p149 = pneg %p143
      %p150 = scmp.eq.s32.totalorder %s14, 3
      %p151 = por %p149, %p150
      %p152 = scmp.ne.s32.totalorder %s144, %s147
      %p153 = scmp.eq.s32.totalorder %s14, 0
      %p154 = por %p152, %p153
      %p155 = scmp.ne.s32.totalorder %s144, %s147
      %p156 = scmp.eq.s32.totalorder %s19, 3
      %p157 = por %p155, %p156
      %p158 = scmp.ne.s32.totalorder %s147, %s148
      %p159 = scmp.eq.s32.totalorder %s19, 0
      %p160 = por %p158, %p159
      %p161 = scmp.ne.s32.totalorder %s147, %s148
      %p162 = scmp.eq.s32.totalorder %s20, 3
      %p163 = por %p161, %p162
      %p165 = scmp.ne.s32.totalorder %s148, %s164
      %p166 = scmp.eq.s32.totalorder %s20, 0
      %p167 = por %p165, %p166
      %p168 = scmp.le.s32.totalorder 1, %s14
      %p169 = scmp.lt.s32.totalorder %s14, 5
      %p170 = pnand %p168, %p169
      %p171 = pneg %p170
      // Predicated region
      $region9: #{tpu_custom_call.1} parent=5 // pred_check
        _
      $region10: #{tpu_custom_call.1} parent=5 // pred_check_branch
        %173 = sbr.rel (%p170) target = $region12
      $region11: #{tpu_custom_call.1} parent=5 // pred_region
        %s174 = ssub.s32 %s14, 1
        // Predicated region
        $region13: #{tpu_custom_call.1} parent=11 // pred_check
          %p175 = pneg %p113
        $region14: #{tpu_custom_call.1} parent=11 // pred_check_branch
          %177 = sbr.rel (%p175) target = $region16
        $region15: #{tpu_custom_call.1} parent=11 // pred_region
          _
        $region16: #{tpu_custom_call.1} parent=11 // pred_fallthru
          _
        // Predicated region
        $region17: #{tpu_custom_call.1} parent=11 // pred_check
          %p178 = pneg %p134
        $region18: #{tpu_custom_call.1} parent=11 // pred_check_branch
          %180 = sbr.rel (%p178) target = $region20
        $region19: #{tpu_custom_call.1} parent=11 // pred_region
          _
        $region20: #{tpu_custom_call.1} parent=11 // pred_fallthru
          _
      $region12: #{tpu_custom_call.1} parent=5 // pred_fallthru
        _
      %p181 = scmp.lt.s32.totalorder %s14, 4
      // Predicated region
      $region21: #{tpu_custom_call.1} parent=5 // pred_check
        %p182 = pneg %p181
      $region22: #{tpu_custom_call.1} parent=5 // pred_check_branch
        %184 = sbr.rel (%p182) target = $region24
      $region23: #{tpu_custom_call.1} parent=5 // pred_region
        // Predicated region
        $region25: #{tpu_custom_call.1} parent=23 // pred_check
          %p185 = pneg %p34
        $region26: #{tpu_custom_call.1} parent=23 // pred_check_branch
          %187 = sbr.rel (%p185) target = $region28
        $region27: #{tpu_custom_call.1} parent=23 // pred_region
          %s188 = smul.u32 8, %s14
          %p189 = scmp.lt.s32.totalorder %s188, 31
          %s190 = scalar_select %p189, %s188, 31
          %s191 = smul.addr %s190, 4
          %s192 = scalar_lea.vmem %s0, %s191
          %s193 = smul.u32 8, %s14
        $region28: #{tpu_custom_call.1} parent=23 // pred_fallthru
          _
        // Predicated region
        $region29: #{tpu_custom_call.1} parent=23 // pred_check
          %p194 = pneg %p60
        $region30: #{tpu_custom_call.1} parent=23 // pred_check_branch
          %196 = sbr.rel (%p194) target = $region32
        $region31: #{tpu_custom_call.1} parent=23 // pred_region
          %s197 = smul.u32 8, %s14
          %p198 = scmp.lt.s32.totalorder %s197, 31
          %s199 = scalar_select %p198, %s197, 31
          %s200 = smul.addr %s199, 4
          %s201 = scalar_lea.vmem %s1, %s200
          %s202 = smul.u32 8, %s14
        $region32: #{tpu_custom_call.1} parent=23 // pred_fallthru
          _
        // Predicated region
        $region33: #{tpu_custom_call.1} parent=23 // pred_check
          %p203 = pneg %p86
        $region34: #{tpu_custom_call.1} parent=23 // pred_check_branch
          %205 = sbr.rel (%p203) target = $region36
        $region35: #{tpu_custom_call.1} parent=23 // pred_region
          %s206 = smul.u32 8, %s14
          %p207 = scmp.lt.s32.totalorder %s206, 31
          %s208 = scalar_select %p207, %s206, 31
          %s209 = smul.addr %s208, 8
          %s210 = scalar_lea.vmem %s2, %s209
          %s211 = smul.u32 8, %s14
        $region36: #{tpu_custom_call.1} parent=23 // pred_fallthru
          _
      $region24: #{tpu_custom_call.1} parent=5 // pred_fallthru
        _
      %p212 = scmp.le.s32.totalorder 1, %s14
      %p213 = scmp.lt.s32.totalorder %s14, 5
      %p214 = pnand %p212, %p213
      %p215 = pneg %p214
      // Predicated region
      $region37: #{tpu_custom_call.1} parent=5 // pred_check
        _
      $region38: #{tpu_custom_call.1} parent=5 // pred_check_branch
        %217 = sbr.rel (%p214) target = $region40
      $region39: #{tpu_custom_call.1} parent=5 // pred_region
        %s218 = ssub.s32 %s14, 1
        %s219 = smul.u32 8, %s19
        %p220 = scmp.lt.s32.totalorder %s219, 31
        %s221 = scalar_select %p220, %s219, 31
        %s222 = smul.addr %s221, 4
        %s223 = scalar_lea.vmem %s0, %s222
        %p224 = pneg %p40
        %p225 = pneg %p37
        %s226 = smul.u32 8, %s19
        %p227 = scmp.lt.s32.totalorder %s226, 31
        %s228 = scalar_select %p227, %s226, 31
        %s229 = smul.addr %s228, 4
        %s230 = scalar_lea.vmem %s1, %s229
        %p231 = pneg %p66
        %p232 = pneg %p63
        %s233 = smul.u32 8, %s19
        %p234 = scmp.lt.s32.totalorder %s233, 31
        %s235 = scalar_select %p234, %s233, 31
        %s236 = smul.addr %s235, 8
        %s237 = scalar_lea.vmem %s2, %s236
        %p238 = pneg %p92
        %p239 = pneg %p89
        %p240 = pneg %p113
        %p241 = pneg %p110
        %p242 = pneg %p134
        %p243 = pneg %p131
        %p244 = pneg %p160
        %p245 = pneg %p157
        %s246 = sand.u32 %s147, 1
        %s247 = scalar_lea.sflag [#allocation3], %s246
        %s248 = sand.u32 %s147, 1
        %s249 = smul.addr %s248, 8
        %s250 = scalar_lea.vmem [#allocation2], %s249
        %s251 = smul.u32 8, %s19
        %p252 = scmp.lt.s32.totalorder %s251, 31
        %s253 = scalar_select %p252, %s251, 31
        %s254 = smul.addr %s253, 4
        %s255 = scalar_lea.vmem %s0, %s254
        %s256 = smul.u32 8, %s19
        %s257 = smul.u32 8, %s19
        %p258 = scmp.lt.s32.totalorder %s257, 31
        %s259 = scalar_select %p258, %s257, 31
        %s260 = smul.addr %s259, 4
        %s261 = scalar_lea.vmem %s1, %s260
        %s262 = smul.u32 8, %s19
        %s263 = smul.u32 8, %s19
        %p264 = scmp.lt.s32.totalorder %s263, 31
        %s265 = scalar_select %p264, %s263, 31
        %s266 = smul.addr %s265, 8
        %s267 = scalar_lea.vmem %s2, %s266
        %s268 = smul.u32 8, %s19
        %v270 = vld [vmem:[%s255] sm:$0xf]
        %v271 = vld [vmem:[%s255 + $0x4] sm:$0xf]
        %v272 = vld [vmem:[%s255 + $0x8] sm:$0xf]
        %v273 = vld [vmem:[%s255 + $0xc] sm:$0xf]
        %v274 = vld [vmem:[%s255 + $0x10] sm:$0xf]
        %v275 = vld [vmem:[%s255 + $0x14] sm:$0xf]
        %v276 = vld [vmem:[%s255 + $0x18] sm:$0xf]
        %v277 = vld [vmem:[%s255 + $0x1c] sm:$0xf]
        %v278 = vld [vmem:[%s3] sm:$0xf]
        %v279 = vld [vmem:[%s3 + $0x4] sm:$0xf]
        %v280 = vld [vmem:[%s3 + $0x8] sm:$0xf]
        %v281 = vld [vmem:[%s3 + $0xc] sm:$0xf]
        %v282 = vld [vmem:[%s3 + $0x10] sm:$0xf]
        %v283 = vld [vmem:[%s3 + $0x14] sm:$0xf]
        %v284 = vld [vmem:[%s3 + $0x18] sm:$0xf]
        %v285 = vld [vmem:[%s3 + $0x1c] sm:$0xf]
        %v286 = vld [vmem:[%s3 + $0x20] sm:$0xf]
        %v287 = vld [vmem:[%s3 + $0x24] sm:$0xf]
        %v288 = vld [vmem:[%s3 + $0x28] sm:$0xf]
        %v289 = vld [vmem:[%s3 + $0x2c] sm:$0xf]
        %v290 = vld [vmem:[%s3 + $0x30] sm:$0xf]
        %v291 = vld [vmem:[%s3 + $0x34] sm:$0xf]
        %v292 = vld [vmem:[%s3 + $0x38] sm:$0xf]
        %v293 = vld [vmem:[%s3 + $0x3c] sm:$0xf]
        %v294 = vunpack.c.l.bf16 %v270
        %v295 = vunpack.c.l.bf16 %v271
        %v296 = vunpack.c.l.bf16 %v272
        %v297 = vunpack.c.l.bf16 %v273
        %v298 = vunpack.c.l.bf16 %v274
        %v299 = vunpack.c.l.bf16 %v275
        %v300 = vunpack.c.l.bf16 %v276
        %v301 = vunpack.c.l.bf16 %v277
        %v302 = vld [vmem:[%s261] sm:$0xf]
        %v303 = vld [vmem:[%s261 + $0x4] sm:$0xf]
        %v304 = vld [vmem:[%s261 + $0x8] sm:$0xf]
        %v305 = vld [vmem:[%s261 + $0xc] sm:$0xf]
        %v306 = vld [vmem:[%s261 + $0x10] sm:$0xf]
        %v307 = vld [vmem:[%s261 + $0x14] sm:$0xf]
        %v308 = vld [vmem:[%s261 + $0x18] sm:$0xf]
        %v309 = vld [vmem:[%s261 + $0x1c] sm:$0xf]
        %v310 = vunpack.c.l.bf16 %v302
        %v311 = vunpack.c.l.bf16 %v303
        %v312 = vunpack.c.l.bf16 %v304
        %v313 = vunpack.c.l.bf16 %v305
        %v314 = vunpack.c.l.bf16 %v306
        %v315 = vunpack.c.l.bf16 %v307
        %v316 = vunpack.c.l.bf16 %v308
        %v317 = vunpack.c.l.bf16 %v309
        %v318 = vmul.f32 %v310, 1e-05
        %v319 = vmul.f32 %v311, 1e-05
        %v320 = vmul.f32 %v312, 1e-05
        %v321 = vmul.f32 %v313, 1e-05
        %v322 = vmul.f32 %v314, 1e-05
        %v323 = vmul.f32 %v315, 1e-05
        %v324 = vmul.f32 %v316, 1e-05
        %v325 = vmul.f32 %v317, 1e-05
        %v326 = vld [vmem:[%s267] sm:$0xff]
        %v327 = vld [vmem:[%s267 + $0x8] sm:$0xff]
        %v328 = vld [vmem:[%s267 + $0x10] sm:$0xff]
        %v329 = vld [vmem:[%s267 + $0x18] sm:$0xff]
        %v330 = vld [vmem:[%s267 + $0x20] sm:$0xff]
        %v331 = vld [vmem:[%s267 + $0x28] sm:$0xff]
        %v332 = vld [vmem:[%s267 + $0x30] sm:$0xff]
        %v333 = vld [vmem:[%s267 + $0x38] sm:$0xff]
        %v334 = vld [vmem:[%s4] sm:$0x1]
        %v336 = vlaneseq
        %v337 = vshrl.u32 %v336, 7
        %v338 = vsub.s32 0, %v337
        %v339 = vrot.slane %v334, %v338
        %v341 = vsub.f32 %v326, %v339
        %v342 = vsub.f32 %v327, %v339
        %v343 = vsub.f32 %v328, %v339
        %v344 = vsub.f32 %v329, %v339
        %v345 = vsub.f32 %v330, %v339
        %v346 = vsub.f32 %v331, %v339
        %v347 = vsub.f32 %v332, %v339
        %v348 = vsub.f32 %v333, %v339
        %v349 = vadd.f32 %v294, %v318
        %v350 = vadd.f32 %v295, %v319
        %v351 = vadd.f32 %v296, %v320
        %v352 = vadd.f32 %v297, %v321
        %v353 = vadd.f32 %v298, %v322
        %v354 = vadd.f32 %v299, %v323
        %v355 = vadd.f32 %v300, %v324
        %v356 = vadd.f32 %v301, %v325
        %v357 = vpack.c.bf16 %v350, %v349
        %v358 = vpack.c.bf16 %v352, %v351
        %v359 = vpack.c.bf16 %v354, %v353
        %v360 = vpack.c.bf16 %v356, %v355
        %v377 = vunpack.c.l.b16 %v278
        %v378 = vunpack.c.l.b16 %v279
        %v379 = vunpack.c.l.b16 %v280
        %v380 = vunpack.c.l.b16 %v281
        %v381 = vunpack.c.l.b16 %v282
        %v382 = vunpack.c.l.b16 %v283
        %v383 = vunpack.c.l.b16 %v284
        %v384 = vunpack.c.l.b16 %v285
        %v385 = vunpack.c.l.b16 %v286
        %v386 = vunpack.c.l.b16 %v287
        %v387 = vunpack.c.l.b16 %v288
        %v388 = vunpack.c.l.b16 %v289
        %v389 = vunpack.c.l.b16 %v290
        %v390 = vunpack.c.l.b16 %v291
        %v391 = vunpack.c.l.b16 %v292
        %v392 = vunpack.c.l.b16 %v293
        %v393 = vpack.c.b16 %v378, %v377
        %v394 = vpack.c.b16 %v380, %v379
        %v395 = vpack.c.b16 %v382, %v381
        %v396 = vpack.c.b16 %v384, %v383
        %v397 = vpack.c.b16 %v386, %v385
        %v398 = vpack.c.b16 %v388, %v387
        %v399 = vpack.c.b16 %v390, %v389
        %v400 = vpack.c.b16 %v392, %v391
        %409 = vmatprep.subr.bf16.mxu0 0
        %410 = vmatpush1.bf16.msra.mxu0 %v393
        %411 = vmatprep.subr.bf16.mxu0 0
        %412 = vmatpush1.bf16.msra.mxu0 %v394
        %413 = vmatprep.subr.bf16.mxu0 0
        %414 = vmatpush1.bf16.msra.mxu0 %v395
        %415 = vmatprep.subr.bf16.mxu0 0
        %416 = vmatpush1.bf16.msra.mxu0 %v396
        %417 = vmatprep.subr.bf16.mxu0 0
        %418 = vmatpush1.bf16.msra.mxu0 %v397
        %419 = vmatprep.subr.bf16.mxu0 0
        %420 = vmatpush1.bf16.msra.mxu0 %v398
        %421 = vmatprep.subr.bf16.mxu0 0
        %422 = vmatpush1.bf16.msra.mxu0 %v399
        %423 = vmatprep.subr.bf16.mxu0 0
        %424 = vmatpush1.bf16.msra.mxu0 %v400
        %425 = vmatprep.subr.bf16.mxu0 0
        %426 = vmatpush1.bf16.msra.mxu0 0
        %427 = vmatprep.subr.bf16.mxu0 0
        %428 = vmatpush1.bf16.msra.mxu0 0
        %429 = vmatprep.subr.bf16.mxu0 0
        %430 = vmatpush1.bf16.msra.mxu0 0
        %431 = vmatprep.subr.bf16.mxu0 0
        %432 = vmatpush1.bf16.msra.mxu0 0
        %433 = vmatprep.subr.bf16.mxu0 0
        %434 = vmatpush1.bf16.msra.mxu0 0
        %435 = vmatprep.subr.bf16.mxu0 0
        %436 = vmatpush1.bf16.msra.mxu0 0
        %437 = vmatprep.subr.bf16.mxu0 0
        %438 = vmatpush1.bf16.msra.mxu0 0
        %439 = vmatprep.subr.bf16.mxu0 0
        %440 = vmatpush1.bf16.msra.mxu0 0
        %441 = vmatprep.mubr.bf16.mxu0 0
        %442 = vmatmul.mubr.bf16.gmra.mrb[0].mxu0 %v357
        %v443 = vpop.f32.mrb[0].mxu0
        %v444 = vadd.f32 0.0, %v443
        %v445 = vpop.f32.mrb[0].mxu0
        %v446 = vpop.f32.mrb[0].mxu0
        %v447 = vadd.f32 0.0, %v446
        %v448 = vpop.f32.mrb[0].mxu0
        %449 = vmatprep.mubr.bf16.mxu0 0
        %450 = vmatmul.mubr.bf16.gmra.mrb[0].mxu0 %v358
        %v451 = vpop.f32.mrb[0].mxu0
        %v452 = vadd.f32 0.0, %v451
        %v453 = vpop.f32.mrb[0].mxu0
        %v454 = vpop.f32.mrb[0].mxu0
        %v455 = vadd.f32 0.0, %v454
        %v456 = vpop.f32.mrb[0].mxu0
        %457 = vmatprep.mubr.bf16.mxu0 0
        %458 = vmatmul.mubr.bf16.gmra.mrb[0].mxu0 %v359
        %v459 = vpop.f32.mrb[0].mxu0
        %v460 = vadd.f32 0.0, %v459
        %v461 = vpop.f32.mrb[0].mxu0
        %v462 = vpop.f32.mrb[0].mxu0
        %v463 = vadd.f32 0.0, %v462
        %v464 = vpop.f32.mrb[0].mxu0
        %465 = vmatprep.mubr.bf16.mxu0 0
        %466 = vmatmul.mubr.bf16.gmra.mrb[0].mxu0 %v360
        %v467 = vpop.f32.mrb[0].mxu0
        %v468 = vadd.f32 0.0, %v467
        %v469 = vpop.f32.mrb[0].mxu0
        %v470 = vpop.f32.mrb[0].mxu0
        %v471 = vadd.f32 0.0, %v470
        %v472 = vpop.f32.mrb[0].mxu0
        %473 = vdwg.mxu0
        %v474 = vsub.f32 %v444, %v341
        %v475 = vsub.f32 %v447, %v342
        %v476 = vsub.f32 %v452, %v343
        %v477 = vsub.f32 %v455, %v344
        %v478 = vsub.f32 %v460, %v345
        %v479 = vsub.f32 %v463, %v346
        %v480 = vsub.f32 %v468, %v347
        %v481 = vsub.f32 %v471, %v348
        %v482 = vpack.c.bf16 %v475, %v474
        %v483 = vpack.c.bf16 %v477, %v476
        %v484 = vpack.c.bf16 %v479, %v478
        %v485 = vpack.c.bf16 %v481, %v480
        %vm486 = vcmask 261120
        %v488 = vsel %vm486, %v482, 0
        %v491 = vsel %vm486, %v483, 0
        %v494 = vsel %vm486, %v484, 0
        %v497 = vsel %vm486, %v485, 0
        %v500 = vsel %vm486, %v393, 0
        %v503 = vsel %vm486, %v394, 0
        %v506 = vsel %vm486, %v395, 0
        %v509 = vsel %vm486, %v396, 0
        %v512 = vsel %vm486, %v397, 0
        %v515 = vsel %vm486, %v398, 0
        %v518 = vsel %vm486, %v399, 0
        %v521 = vsel %vm486, %v400, 0
        %523 = vmatprep.subr.bf16.mxu0 0
        %524 = vmatpush1.bf16.xpose.msra.mxu0 %v500
        %525 = vmatprep.subr.bf16.mxu0 0
        %526 = vmatpush1.bf16.xpose.msra.mxu0 %v503
        %527 = vmatprep.subr.bf16.mxu0 0
        %528 = vmatpush1.bf16.xpose.msra.mxu0 %v506
        %529 = vmatprep.subr.bf16.mxu0 0
        %530 = vmatpush1.bf16.xpose.msra.mxu0 %v509
        %531 = vmatprep.subr.bf16.mxu0 0
        %532 = vmatpush1.bf16.xpose.msra.mxu0 %v512
        %533 = vmatprep.subr.bf16.mxu0 0
        %534 = vmatpush1.bf16.xpose.msra.mxu0 %v515
        %535 = vmatprep.subr.bf16.mxu0 0
        %536 = vmatpush1.bf16.xpose.msra.mxu0 %v518
        %537 = vmatprep.subr.bf16.mxu0 0
        %538 = vmatpush1.bf16.xpose.msra.mxu0 %v521
        %539 = vmatprep.subr.bf16.mxu0 0
        %540 = vmatpush1.bf16.xpose.msra.mxu0 0
        %541 = vmatprep.subr.bf16.mxu0 0
        %542 = vmatpush1.bf16.xpose.msra.mxu0 0
        %543 = vmatprep.subr.bf16.mxu0 0
        %544 = vmatpush1.bf16.xpose.msra.mxu0 0
        %545 = vmatprep.subr.bf16.mxu0 0
        %546 = vmatpush1.bf16.xpose.msra.mxu0 0
        %547 = vmatprep.subr.bf16.mxu0 0
        %548 = vmatpush1.bf16.xpose.msra.mxu0 0
        %549 = vmatprep.subr.bf16.mxu0 0
        %550 = vmatpush1.bf16.xpose.msra.mxu0 0
        %551 = vmatprep.subr.bf16.mxu0 0
        %552 = vmatpush1.bf16.xpose.msra.mxu0 0
        %553 = vmatprep.subr.bf16.mxu0 0
        %554 = vmatpush1.bf16.xpose.msra.mxu0 0
        %555 = vmatprep.mubr.bf16.mxu0 0
        %556 = vmatmul.mubr.bf16.gmra.mrb[0].mxu0 %v488
        %v557 = vpop.f32.mrb[0].mxu0
        %v558 = vadd.f32 0.0, %v557
        %v559 = vpop.f32.mrb[0].mxu0
        %v560 = vpop.f32.mrb[0].mxu0
        %v561 = vadd.f32 0.0, %v560
        %v562 = vpop.f32.mrb[0].mxu0
        %563 = vmatprep.mubr.bf16.mxu0 0
        %564 = vmatmul.mubr.bf16.gmra.mrb[0].mxu0 %v491
        %v565 = vpop.f32.mrb[0].mxu0
        %v566 = vadd.f32 0.0, %v565
        %v567 = vpop.f32.mrb[0].mxu0
        %v568 = vpop.f32.mrb[0].mxu0
        %v569 = vadd.f32 0.0, %v568
        %v570 = vpop.f32.mrb[0].mxu0
        %571 = vmatprep.mubr.bf16.mxu0 0
        %572 = vmatmul.mubr.bf16.gmra.mrb[0].mxu0 %v494
        %v573 = vpop.f32.mrb[0].mxu0
        %v574 = vadd.f32 0.0, %v573
        %v575 = vpop.f32.mrb[0].mxu0
        %v576 = vpop.f32.mrb[0].mxu0
        %v577 = vadd.f32 0.0, %v576
        %v578 = vpop.f32.mrb[0].mxu0
        %579 = vmatprep.mubr.bf16.mxu0 0
        %580 = vmatmul.mubr.bf16.gmra.mrb[0].mxu0 %v497
        %v581 = vpop.f32.mrb[0].mxu0
        %v582 = vadd.f32 0.0, %v581
        %v583 = vpop.f32.mrb[0].mxu0
        %v584 = vpop.f32.mrb[0].mxu0
        %v585 = vadd.f32 0.0, %v584
        %v586 = vpop.f32.mrb[0].mxu0
        %587 = vdwg.mxu0
        %v588 = vmul.f32 %v558, 2.4414064e-07
        %v589 = vmul.f32 %v561, 2.4414064e-07
        %v590 = vmul.f32 %v566, 2.4414064e-07
        %v591 = vmul.f32 %v569, 2.4414064e-07
        %v592 = vmul.f32 %v574, 2.4414064e-07
        %v593 = vmul.f32 %v577, 2.4414064e-07
        %v594 = vmul.f32 %v582, 2.4414064e-07
        %v595 = vmul.f32 %v585, 2.4414064e-07
        %v596 = vadd.f32 %v318, %v588
        %v597 = vadd.f32 %v319, %v589
        %v598 = vadd.f32 %v320, %v590
        %v599 = vadd.f32 %v321, %v591
        %v600 = vadd.f32 %v322, %v592
        %v601 = vadd.f32 %v323, %v593
        %v602 = vadd.f32 %v324, %v594
        %v603 = vadd.f32 %v325, %v595
        %v604 = vand.u32 2147483647, %v596
        %v605 = vand.u32 2147483647, %v597
        %v606 = vand.u32 2147483647, %v598
        %v607 = vand.u32 2147483647, %v599
        %v608 = vand.u32 2147483647, %v600
        %v609 = vand.u32 2147483647, %v601
        %v610 = vand.u32 2147483647, %v602
        %v611 = vand.u32 2147483647, %v603
        %612 = vmax.xlane.f32.xlu0 %v604
        %v613 = vpop.xlane.xlu0 %612
        %614 = vmax.xlane.f32.xlu0 %v605
        %v615 = vpop.xlane.xlu0 %614
        %616 = vmax.xlane.f32.xlu0 %v606
        %v617 = vpop.xlane.xlu0 %616
        %618 = vmax.xlane.f32.xlu0 %v607
        %v619 = vpop.xlane.xlu0 %618
        %620 = vmax.xlane.f32.xlu0 %v608
        %v621 = vpop.xlane.xlu0 %620
        %622 = vmax.xlane.f32.xlu0 %v609
        %v623 = vpop.xlane.xlu0 %622
        %624 = vmax.xlane.f32.xlu0 %v610
        %v625 = vpop.xlane.xlu0 %624
        %626 = vmax.xlane.f32.xlu0 %v611
        %v627 = vpop.xlane.xlu0 %626
        %v628 = vadd.f32 %v613, 1e-06
        %v629 = vadd.f32 %v615, 1e-06
        %v630 = vadd.f32 %v617, 1e-06
        %v631 = vadd.f32 %v619, 1e-06
        %v632 = vadd.f32 %v621, 1e-06
        %v633 = vadd.f32 %v623, 1e-06
        %v634 = vadd.f32 %v625, 1e-06
        %v635 = vadd.f32 %v627, 1e-06
        %v636 = vrcp.pop %v628
        %v637 = vrcp.pop %v629
        %v638 = vrcp.pop %v630
        %v639 = vrcp.pop %v631
        %v640 = vrcp.pop %v632
        %v641 = vrcp.pop %v633
        %v642 = vrcp.pop %v634
        %v643 = vrcp.pop %v635
        %v644 = vmul.f32 %v596, %v636
        %v645 = vmul.f32 %v597, %v637
        %v646 = vmul.f32 %v598, %v638
        %v647 = vmul.f32 %v599, %v639
        %v648 = vmul.f32 %v600, %v640
        %v649 = vmul.f32 %v601, %v641
        %v650 = vmul.f32 %v602, %v642
        %v651 = vmul.f32 %v603, %v643
        %v652 = vadd.f32 %v294, %v644
        %v653 = vadd.f32 %v295, %v645
        %v654 = vadd.f32 %v296, %v646
        %v655 = vadd.f32 %v297, %v647
        %v656 = vadd.f32 %v298, %v648
        %v657 = vadd.f32 %v299, %v649
        %v658 = vadd.f32 %v300, %v650
        %v659 = vadd.f32 %v301, %v651
        %v660 = vpack.c.bf16 %v653, %v652
        %v661 = vpack.c.bf16 %v655, %v654
        %v662 = vpack.c.bf16 %v657, %v656
        %v663 = vpack.c.bf16 %v659, %v658
        %664 = vmatprep.subr.bf16.mxu0 0
        %665 = vmatpush1.bf16.msra.mxu0 %v393
        %666 = vmatprep.subr.bf16.mxu0 0
        %667 = vmatpush1.bf16.msra.mxu0 %v394
        %668 = vmatprep.subr.bf16.mxu0 0
        %669 = vmatpush1.bf16.msra.mxu0 %v395
        %670 = vmatprep.subr.bf16.mxu0 0
        %671 = vmatpush1.bf16.msra.mxu0 %v396
        %672 = vmatprep.subr.bf16.mxu0 0
        %673 = vmatpush1.bf16.msra.mxu0 %v397
        %674 = vmatprep.subr.bf16.mxu0 0
        %675 = vmatpush1.bf16.msra.mxu0 %v398
        %676 = vmatprep.subr.bf16.mxu0 0
        %677 = vmatpush1.bf16.msra.mxu0 %v399
        %678 = vmatprep.subr.bf16.mxu0 0
        %679 = vmatpush1.bf16.msra.mxu0 %v400
        %680 = vmatprep.subr.bf16.mxu0 0
        %681 = vmatpush1.bf16.msra.mxu0 0
        %682 = vmatprep.subr.bf16.mxu0 0
        %683 = vmatpush1.bf16.msra.mxu0 0
        %684 = vmatprep.subr.bf16.mxu0 0
        %685 = vmatpush1.bf16.msra.mxu0 0
        %686 = vmatprep.subr.bf16.mxu0 0
        %687 = vmatpush1.bf16.msra.mxu0 0
        %688 = vmatprep.subr.bf16.mxu0 0
        %689 = vmatpush1.bf16.msra.mxu0 0
        %690 = vmatprep.subr.bf16.mxu0 0
        %691 = vmatpush1.bf16.msra.mxu0 0
        %692 = vmatprep.subr.bf16.mxu0 0
        %693 = vmatpush1.bf16.msra.mxu0 0
        %694 = vmatprep.subr.bf16.mxu0 0
        %695 = vmatpush1.bf16.msra.mxu0 0
        %696 = vmatprep.mubr.bf16.mxu0 0
        %697 = vmatmul.mubr.bf16.gmra.mrb[0].mxu0 %v660
        %v698 = vpop.f32.mrb[0].mxu0
        %v699 = vadd.f32 0.0, %v698
        %v700 = vpop.f32.mrb[0].mxu0
        %v701 = vpop.f32.mrb[0].mxu0
        %v702 = vadd.f32 0.0, %v701
        %v703 = vpop.f32.mrb[0].mxu0
        %704 = vmatprep.mubr.bf16.mxu0 0
        %705 = vmatmul.mubr.bf16.gmra.mrb[0].mxu0 %v661
        %v706 = vpop.f32.mrb[0].mxu0
        %v707 = vadd.f32 0.0, %v706
        %v708 = vpop.f32.mrb[0].mxu0
        %v709 = vpop.f32.mrb[0].mxu0
        %v710 = vadd.f32 0.0, %v709
        %v711 = vpop.f32.mrb[0].mxu0
        %712 = vmatprep.mubr.bf16.mxu0 0
        %713 = vmatmul.mubr.bf16.gmra.mrb[0].mxu0 %v662
        %v714 = vpop.f32.mrb[0].mxu0
        %v715 = vadd.f32 0.0, %v714
        %v716 = vpop.f32.mrb[0].mxu0
        %v717 = vpop.f32.mrb[0].mxu0
        %v718 = vadd.f32 0.0, %v717
        %v719 = vpop.f32.mrb[0].mxu0
        %720 = vmatprep.mubr.bf16.mxu0 0
        %721 = vmatmul.mubr.bf16.gmra.mrb[0].mxu0 %v663
        %v722 = vpop.f32.mrb[0].mxu0
        %v723 = vadd.f32 0.0, %v722
        %v724 = vpop.f32.mrb[0].mxu0
        %v725 = vpop.f32.mrb[0].mxu0
        %v726 = vadd.f32 0.0, %v725
        %v727 = vpop.f32.mrb[0].mxu0
        %728 = vdwg.mxu0
        %v729 = vsub.f32 %v699, %v341
        %v730 = vsub.f32 %v702, %v342
        %v731 = vsub.f32 %v707, %v343
        %v732 = vsub.f32 %v710, %v344
        %v733 = vsub.f32 %v715, %v345
        %v734 = vsub.f32 %v718, %v346
        %v735 = vsub.f32 %v723, %v347
        %v736 = vsub.f32 %v726, %v348
        %v737 = vmul.f32 %v729, %v729
        %v738 = vmul.f32 %v730, %v730
        %v739 = vmul.f32 %v731, %v731
        %v740 = vmul.f32 %v732, %v732
        %v741 = vmul.f32 %v733, %v733
        %v742 = vmul.f32 %v734, %v734
        %v743 = vmul.f32 %v735, %v735
        %v744 = vmul.f32 %v736, %v736
        %v745 = vsel %vm486, %v737, 0.0
        %v746 = vsel %vm486, %v738, 0.0
        %v747 = vadd.f32 %v745, %v746
        %v748 = vsel %vm486, %v739, 0.0
        %v749 = vadd.f32 %v747, %v748
        %v750 = vsel %vm486, %v740, 0.0
        %v751 = vadd.f32 %v749, %v750
        %v752 = vsel %vm486, %v741, 0.0
        %v753 = vadd.f32 %v751, %v752
        %v754 = vsel %vm486, %v742, 0.0
        %v755 = vadd.f32 %v753, %v754
        %v756 = vsel %vm486, %v743, 0.0
        %v757 = vadd.f32 %v755, %v756
        %v758 = vsel %vm486, %v744, 0.0
        %v759 = vadd.f32 %v757, %v758
        %760 = vadd.xlane.f32.xlu0 %v759
        %v761 = vpop.xlane.xlu0 %760
        %v762 = vrot.slane %v761, 4
        %v763 = vadd.f32 %v761, %v762
        %v764 = vrot.slane %v763, 2
        %v765 = vadd.f32 %v763, %v764
        %v766 = vrot.slane %v765, 1
        %v767 = vadd.f32 %v765, %v766
        %s768 = vtos %v767
        %v769 = vstv %s768
        %v770 = vadd.f32 %v769, 0.0
        %771 = vst [vmem:[%s250] sm:$0xff] %v770
        %s772 = sand.u32 %s147, 1
        %s773 = scalar_lea.sflag [#allocation3], %s772
        %s774 = sand.u32 %s147, 1
        %s775 = smul.addr %s774, 8
        %s776 = scalar_lea.vmem [#allocation2], %s775
        // Predicated region
        $region41: #{tpu_custom_call.1} parent=39 // pred_check
          %p777 = pneg %p157
        $region42: #{tpu_custom_call.1} parent=39 // pred_check_branch
          %779 = sbr.rel (%p777) target = $region44
        $region43: #{tpu_custom_call.1} parent=39 // pred_region
          %s781 = ssub.s32 128, 128
          %782 = vsyncadd %s773, %s781
          %s783 = smul.addr %s19, 128
          %s784 = scalar_lea.hbm %s5, %s783
          %s786 = sshll.u32 %s776, 4
          %s787 = int_to_ptr.vmem [resolvable:$true] %s786
          %789 = dma.vmem_to_hbm [thread:$0]  %s787, 128, %s784, %s773
        $region44: #{tpu_custom_call.1} parent=39 // pred_fallthru
          _
      $region40: #{tpu_custom_call.1} parent=5 // pred_fallthru
        _
      %p790 = scmp.le.s32.totalorder 2, %s14
      // Predicated region
      $region45: #{tpu_custom_call.1} parent=5 // pred_check
        %p791 = pneg %p790
      $region46: #{tpu_custom_call.1} parent=5 // pred_check_branch
        %793 = sbr.rel (%p791) target = $region48
      $region47: #{tpu_custom_call.1} parent=5 // pred_region
        %s794 = ssub.s32 %s14, 2
        // Predicated region
        $region49: #{tpu_custom_call.1} parent=47 // pred_check
          %p795 = pneg %p163
        $region50: #{tpu_custom_call.1} parent=47 // pred_check_branch
          %797 = sbr.rel (%p795) target = $region52
        $region51: #{tpu_custom_call.1} parent=47 // pred_region
          %s798 = sand.u32 %s148, 1
          %s799 = scalar_lea.sflag [#allocation3], %s798
          %s800 = sand.u32 %s148, 1
          %s801 = smul.addr %s800, 8
          %s802 = scalar_lea.vmem [#allocation2], %s801
          %803 = dma.done %s799, 128
        $region52: #{tpu_custom_call.1} parent=47 // pred_fallthru
          _
      $region48: #{tpu_custom_call.1} parent=5 // pred_fallthru
        _
    $region6: #{tpu_custom_call.1} parent=1 // loop_footer
      %s18 = sadd.s32 1, %s14
    $region7: #{tpu_custom_call.1} parent=1 // loop_footer_branch
      %13 = sbr.rel target = $region3
    $region8: #{tpu_custom_call.1} parent=1 // loop_exit
      _
    %804 = vsyncpa [#allocation3], 1
    %s805 = scalar_lea.sflag [#allocation3], 1
    %806 = vsyncpa %s805, 1

</llo_original>
